<compile_context>
chip_gen: v7x
topology: tpu7x:2x2x1
jax: 0.10.0
libtpu: 0.0.40
codegen_flags: <defaults>
</compile_context>

<pallas_src>
import functools

import jax
import jax.numpy as jnp
from jax.experimental import pallas as pl
from jax.experimental.pallas import tpu as pltpu


def _round_up(x, m):
    return ((x + m - 1) // m) * m


def _lm_ce_kernel(x_ref, w_ref, tgt_ref, nll_ref, m_ref, l_ref, t_ref,
                  *, tn, v_actual, mask_vocab_tail):
    """One (row-tile, vocab-tile) step of the online-LSE cross entropy."""
    k = pl.program_id(1)
    nk = pl.num_programs(1)

    @pl.when(k == 0)
    def _():
        m_ref[...] = jnp.full_like(m_ref, -jnp.inf)
        l_ref[...] = jnp.zeros_like(l_ref)
        t_ref[...] = jnp.zeros_like(t_ref)

    # (TM, TN) logits for this vocab tile; bf16 MXU inputs, f32 accumulation.
    logits = jnp.dot(x_ref[...], w_ref[...],
                     preferred_element_type=jnp.float32)

    # (1, TN) lane iota of global vocab ids for this tile — broadcasts against
    # the (TM, 1) targets / (TM, TN) logits (no full (TM, TN) iota needed).
    lane_ids = jax.lax.broadcasted_iota(jnp.int32, (1, tn), 1) + k * tn

    if mask_vocab_tail:
        # Only emitted when V % TN != 0.  Kills the unspecified out-of-range
        # columns of the (non-divisible) last vocab block before max/exp/
        # gather; select (not add) so NaN garbage cannot propagate.  -1e30 is
        # safe only because logits stay f32.
        logits = jnp.where(lane_ids < v_actual, logits, -1e30)

    # Online log-sum-exp update (running max + rescaled sum).
    m_prev = m_ref[...]
    m_new = jnp.maximum(m_prev, jnp.max(logits, axis=-1, keepdims=True))
    alpha = jnp.exp(m_prev - m_new)
    l_ref[...] = alpha * l_ref[...] + jnp.sum(jnp.exp(logits - m_new),
                                              axis=-1, keepdims=True)
    m_ref[...] = m_new

    # Target logit gather restricted to this tile.
    hit = lane_ids == tgt_ref[...]
    t_ref[...] += jnp.sum(jnp.where(hit, logits, 0.0), axis=-1, keepdims=True)

    @pl.when(k == nk - 1)
    def _():
        lse = m_ref[...] + jnp.log(l_ref[...])
        nll_ref[...] = lse - t_ref[...]          # -log p(target) per row


def lm_head_ce_loss(hidden, w_out, targets, mask, *, tm=512, tn=512):
    """Fused LM-head + LanguageModelCriterion.

    hidden:  (R, H) float
    w_out:   (H, V) float
    targets: (R,)   int32
    mask:    (R,)   float
    returns scalar float32 loss = sum(-logp_target * mask) / sum(mask)
    """
    R, H = hidden.shape
    V = w_out.shape[1]

    # --- tile-size selection ------------------------------------------------
    TM = min(tm, _round_up(R, 16))
    # Keep >= 2 row tiles when possible so the "parallel" row axis shards
    # across both TensorCores on v7x (single-TC v5e/v6e unaffected).
    if R >= 32:
        TM = min(TM, _round_up((R + 1) // 2, 16))
    TN = min(tn, _round_up(V, 128))

    # VMEM guardrail (v7x has only 64 MiB physical VMEM): shrink tiles until
    # double-buffered bf16 tiles + f32 logits temp + lane-padded scratch fit.
    def _footprint(tm_, tn_):
        b = 2 * (tm_ * H + H * tn_) * 2          # double-buffered bf16 hidden + weight tiles
        b += tm_ * tn_ * 4                       # f32 logits temporary
        b += 7 * tm_ * 128 * 4                   # (TM,1) scratch x3 + tgt/out double buffers (lane-padded)
        return b

    VMEM_BUDGET = 44 << 20
    while _footprint(TM, TN) > VMEM_BUDGET and TM > 128:
        TM = max(128, _round_up(TM // 2, 16))
    while _footprint(TM, TN) > VMEM_BUDGET and TN > 128:
        TN = max(128, _round_up(TN // 2, 128))

    num_row_tiles = -(-R // TM)
    num_voc_tiles = -(-V // TN)
    grid = (num_row_tiles, num_voc_tiles)

    vmem_limit = int(min(max(32 << 20, _footprint(TM, TN) + (16 << 20)),
                         64 << 20))

    # bf16 MXU inputs; accumulation stays f32 inside the kernel.  No host-side
    # padding of W/hidden — non-divisible last blocks are masked in-kernel.
    hidden_b = hidden.astype(jnp.bfloat16)
    w_b = w_out.astype(jnp.bfloat16)
    tgt2 = targets.astype(jnp.int32).reshape(R, 1)

    kernel = functools.partial(_lm_ce_kernel, tn=TN, v_actual=V,
                               mask_vocab_tail=(V % TN != 0))

    nll = pl.pallas_call(
        kernel,
        out_shape=jax.ShapeDtypeStruct((R, 1), jnp.float32),
        grid_spec=pltpu.PrefetchScalarGridSpec(
            num_scalar_prefetch=0,
            grid=grid,
            in_specs=[
                pl.BlockSpec((TM, H), lambda i, k: (i, 0)),   # hidden row tile
                pl.BlockSpec((H, TN), lambda i, k: (0, k)),   # streamed weight tile
                pl.BlockSpec((TM, 1), lambda i, k: (i, 0)),   # targets per row tile
            ],
            out_specs=pl.BlockSpec((TM, 1), lambda i, k: (i, 0)),
            scratch_shapes=[
                pltpu.VMEM((TM, 1), jnp.float32),   # running max
                pltpu.VMEM((TM, 1), jnp.float32),   # running sum-exp
                pltpu.VMEM((TM, 1), jnp.float32),   # target logit
            ],
        ),
        compiler_params=pltpu.CompilerParams(
            dimension_semantics=("parallel", "arbitrary"),
            vmem_limit_bytes=vmem_limit),
        cost_estimate=pl.CostEstimate(
            flops=2 * num_row_tiles * TM * H * num_voc_tiles * TN,
            transcendentals=num_row_tiles * TM * num_voc_tiles * TN,
            # Weight stream is re-read once per row tile.
            bytes_accessed=(num_row_tiles * H * num_voc_tiles * TN * 2
                            + R * H * 2 + R * 4 + R * 4),
        ),
    )(hidden_b, w_b, tgt2)

    mask_f = mask.astype(jnp.float32)
    num = jnp.sum(nll[:, 0] * mask_f)
    den = jnp.sum(mask_f)           # precondition: sum(mask) > 0
    return num / den


class Params:
    """Deterministic synthetic parameters for the captioning-model glue."""

    def __init__(self, key, vocab, hidden, feat_dim):
        k0, k1, k2, k3 = jax.random.split(key, 4)
        s = 0.02
        self.embed = s * jax.random.normal(k0, (vocab, hidden), jnp.float32)
        self.w_fc = s * jax.random.normal(k1, (feat_dim, hidden), jnp.float32)
        self.w_att = s * jax.random.normal(k2, (feat_dim, hidden), jnp.float32)
        self.w_out = s * jax.random.normal(k3, (hidden, vocab), jnp.float32)


def _model_glue(params, fc_feats, att_feats, labels, att_masks):
    """Lightweight 'model' (embedding + feature fusion) — plain JAX glue."""
    tok = labels[:, :-1]                                      # (B, L)
    emb = params.embed[tok]                                   # (B, L, H)
    fc_ctx = fc_feats @ params.w_fc                           # (B, H)
    att_w = att_masks[..., None]                              # (B, Na, 1)
    att_pool = jnp.sum(att_feats * att_w, axis=1) / (
        jnp.sum(att_w, axis=1) + 1e-6)                        # (B, Df)
    att_ctx = att_pool @ params.w_att                         # (B, H)
    return jnp.tanh(emb + fc_ctx[:, None, :] + att_ctx[:, None, :])  # (B, L, H)


def loss_wrapper_forward(params, fc_feats, att_feats, labels, masks, att_masks,
                         sc_flag=False):
    """JAX/Pallas equivalent of LossWrapper.forward (sc_flag=False path)."""
    assert not sc_flag, "self-critical (sc_flag=True) branch not implemented"
    B, Lp1 = labels.shape
    L = Lp1 - 1

    hidden = _model_glue(params, fc_feats, att_feats, labels, att_masks)
    H = hidden.shape[-1]

    hidden_flat = hidden.reshape(B * L, H)
    targets_flat = labels[:, 1:].reshape(B * L)
    mask_flat = masks[:, 1:].reshape(B * L)

    loss = lm_head_ce_loss(hidden_flat, params.w_out, targets_flat, mask_flat)
    return {"loss": loss}


def reference_forward(params, fc_feats, att_feats, labels, masks, att_masks):
    """Pure-JAX reference mirroring the kernel's numerics (bf16 matmul, f32 acc)."""
    hidden = _model_glue(params, fc_feats, att_feats, labels, att_masks)
    B, L, H = hidden.shape
    h = hidden.reshape(B * L, H).astype(jnp.bfloat16)
    w = params.w_out.astype(jnp.bfloat16)
    logits = jax.lax.dot(h, w, preferred_element_type=jnp.float32)
    logp = jax.nn.log_softmax(logits, axis=-1)
    tgt = labels[:, 1:].reshape(B * L)
    msk = masks[:, 1:].reshape(B * L).astype(jnp.float32)
    tgt_logp = jnp.take_along_axis(logp, tgt[:, None], axis=-1)[:, 0]
    return jnp.sum(-tgt_logp * msk) / jnp.sum(msk)


if __name__ == "__main__":
    # Small shapes consistent with the captioning forward.
    B, L, V, H, Df, Na = 2, 8, 128, 32, 64, 16

    key = jax.random.PRNGKey(0)
    kp, k1, k2, k3, k4 = jax.random.split(key, 5)

    params = Params(kp, vocab=V, hidden=H, feat_dim=Df)

    fc_feats = jax.random.normal(k1, (B, Df), jnp.float32)
    att_feats = jax.random.normal(k2, (B, Na, Df), jnp.float32)
    labels = jax.random.randint(k3, (B, L + 1), 0, V, jnp.int32)
    # masks: 1 for the first few positions, 0 after (typical caption masks).
    pos = jnp.arange(L + 1)[None, :]
    lens = jnp.array([[6], [8]], jnp.int32)
    masks = (pos < lens).astype(jnp.float32)
    att_masks = (jax.random.uniform(k4, (B, Na)) > 0.2).astype(jnp.float32)

    out = loss_wrapper_forward(params, fc_feats, att_feats, labels, masks,
                               att_masks, sc_flag=False)
    loss = jax.block_until_ready(out["loss"])

    ref = jax.block_until_ready(
        reference_forward(params, fc_feats, att_feats, labels, masks, att_masks))

    assert jnp.isfinite(loss), "loss is not finite"
    assert abs(float(loss) - float(ref)) < 2e-3, (float(loss), float(ref))
    print("KERNEL_OK")
</pallas_src>

<mosaic_0001>
module attributes {stable_mosaic.version = 11 : i64} {
  func.func @_lm_ce_kernel(%arg0: i32, %arg1: i32, %arg2: memref<16x32xbf16, #tpu.memory_space<vmem>>, %arg3: memref<32x128xbf16, #tpu.memory_space<vmem>>, %arg4: memref<16x1xi32, #tpu.memory_space<vmem>>, %arg5: memref<16x1xf32, #tpu.memory_space<vmem>>, %arg6: memref<16x1xf32, #tpu.memory_space<vmem>>, %arg7: memref<16x1xf32, #tpu.memory_space<vmem>>, %arg8: memref<16x1xf32, #tpu.memory_space<vmem>>) attributes {dimension_semantics = [#tpu.dimension_semantics<parallel>, #tpu.dimension_semantics<arbitrary>], iteration_bounds = array<i64: 1, 1>, scalar_prefetch = 0 : i64, scratch_operands = 3 : i64, tpu.core_type = #tpu.core_type<tc>, window_params = [{transform_indices = @transform_0, window_bounds = array<i64: 16, 32>}, {transform_indices = @transform_1, window_bounds = array<i64: 32, 128>}, {transform_indices = @transform_2, window_bounds = array<i64: 16, 1>}, {transform_indices = @transform_3, window_bounds = array<i64: 16, 1>}]} {
    %c0_i32 = arith.constant 0 : i32
    %0 = arith.cmpi eq, %arg1, %c0_i32 : i32
    %1 = arith.extui %0 : i1 to i32
    %c0_i32_0 = arith.constant 0 : i32
    %2 = arith.cmpi ne, %1, %c0_i32_0 : i32
    scf.if %2 {
      %cst_24 = arith.constant 0xFF800000 : f32
      %40 = vector.broadcast %cst_24 : f32 to vector<16x1xf32>
      %c0_25 = arith.constant 0 : index
      %c0_26 = arith.constant 0 : index
      %41 = vector.load %arg6[%c0_25, %c0_26] : memref<16x1xf32, #tpu.memory_space<vmem>>, vector<16x1xf32>
      tpu.vector_store %arg6[%c0_25, %c0_26], %40 {strides = array<i32>} : memref<16x1xf32, #tpu.memory_space<vmem>>, vector<16x1xf32>,
      %cst_27 = arith.constant 0.000000e+00 : f32
      %42 = vector.broadcast %cst_27 : f32 to vector<16x1xf32>
      %c0_28 = arith.constant 0 : index
      %c0_29 = arith.constant 0 : index
      %43 = vector.load %arg7[%c0_28, %c0_29] : memref<16x1xf32, #tpu.memory_space<vmem>>, vector<16x1xf32>
      tpu.vector_store %arg7[%c0_28, %c0_29], %42 {strides = array<i32>} : memref<16x1xf32, #tpu.memory_space<vmem>>, vector<16x1xf32>,
      %cst_30 = arith.constant 0.000000e+00 : f32
      %44 = vector.broadcast %cst_30 : f32 to vector<16x1xf32>
      %c0_31 = arith.constant 0 : index
      %c0_32 = arith.constant 0 : index
      %45 = vector.load %arg8[%c0_31, %c0_32] : memref<16x1xf32, #tpu.memory_space<vmem>>, vector<16x1xf32>
      tpu.vector_store %arg8[%c0_31, %c0_32], %44 {strides = array<i32>} : memref<16x1xf32, #tpu.memory_space<vmem>>, vector<16x1xf32>,
    } else {
    }
    %c0 = arith.constant 0 : index
    %c0_1 = arith.constant 0 : index
    %3 = vector.load %arg2[%c0, %c0_1] : memref<16x32xbf16, #tpu.memory_space<vmem>>, vector<16x32xbf16>
    %c0_2 = arith.constant 0 : index
    %c0_3 = arith.constant 0 : index
    %4 = vector.load %arg3[%c0_2, %c0_3] : memref<32x128xbf16, #tpu.memory_space<vmem>>, vector<32x128xbf16>
    %cst = arith.constant dense<0.000000e+00> : vector<16x128xf32>
    %5 = tpu.matmul %3, %4, %cst {dimension_numbers = #tpu.dot_dimension_numbers<[1], [0], [0], [1], [0, 0, 1, 1], [], []>} : vector<16x32xbf16>, vector<32x128xbf16>, vector<16x128xf32> -> vector<16x128xf32>
    %6 = tpu.iota {dimensions = array<i32: 1>} : vector<1x128xi32>
    %c128_i32 = arith.constant 128 : i32
    %7 = arith.muli %arg1, %c128_i32 : i32
    %8 = vector.broadcast %7 : i32 to vector<1x128xi32>
    %9 = arith.addi %6, %8 : vector<1x128xi32>
    %c0_4 = arith.constant 0 : index
    %c0_5 = arith.constant 0 : index
    %10 = vector.load %arg6[%c0_4, %c0_5] : memref<16x1xf32, #tpu.memory_space<vmem>>, vector<16x1xf32>
    %cst_6 = arith.constant dense<0xFF800000> : vector<16xf32>
    %11 = vector.multi_reduction <maximumf>, %5, %cst_6 [1] : vector<16x128xf32> to vector<16xf32>
    %12 = vector.shape_cast %11 : vector<16xf32> to vector<16x1xf32>
    %13 = arith.maximumf %10, %12 : vector<16x1xf32>
    %14 = arith.subf %10, %13 : vector<16x1xf32>
    %15 = math.exp %14 : vector<16x1xf32>
    %c0_7 = arith.constant 0 : index
    %c0_8 = arith.constant 0 : index
    %16 = vector.load %arg7[%c0_7, %c0_8] : memref<16x1xf32, #tpu.memory_space<vmem>>, vector<16x1xf32>
    %17 = arith.mulf %15, %16 : vector<16x1xf32>
    %18 = vector.broadcast %13 : vector<16x1xf32> to vector<16x128xf32>
    %19 = arith.subf %5, %18 : vector<16x128xf32>
    %20 = math.exp %19 : vector<16x128xf32>
    %cst_9 = arith.constant dense<0.000000e+00> : vector<16xf32>
    %21 = vector.multi_reduction <add>, %20, %cst_9 [1] : vector<16x128xf32> to vector<16xf32>
    %22 = vector.shape_cast %21 : vector<16xf32> to vector<16x1xf32>
    %23 = arith.addf %17, %22 : vector<16x1xf32>
    %c0_10 = arith.constant 0 : index
    %c0_11 = arith.constant 0 : index
    %24 = vector.load %arg7[%c0_10, %c0_11] : memref<16x1xf32, #tpu.memory_space<vmem>>, vector<16x1xf32>
    tpu.vector_store %arg7[%c0_10, %c0_11], %23 {strides = array<i32>} : memref<16x1xf32, #tpu.memory_space<vmem>>, vector<16x1xf32>,
    %c0_12 = arith.constant 0 : index
    %c0_13 = arith.constant 0 : index
    %25 = vector.load %arg6[%c0_12, %c0_13] : memref<16x1xf32, #tpu.memory_space<vmem>>, vector<16x1xf32>
    tpu.vector_store %arg6[%c0_12, %c0_13], %13 {strides = array<i32>} : memref<16x1xf32, #tpu.memory_space<vmem>>, vector<16x1xf32>,
    %c0_14 = arith.constant 0 : index
    %c0_15 = arith.constant 0 : index
    %26 = vector.load %arg4[%c0_14, %c0_15] : memref<16x1xi32, #tpu.memory_space<vmem>>, vector<16x1xi32>
    %27 = vector.broadcast %9 : vector<1x128xi32> to vector<16x128xi32>
    %28 = vector.broadcast %26 : vector<16x1xi32> to vector<16x128xi32>
    %29 = arith.cmpi eq, %27, %28 : vector<16x128xi32>
    %c0_16 = arith.constant 0 : index
    %c0_17 = arith.constant 0 : index
    %30 = vector.load %arg8[%c0_16, %c0_17] : memref<16x1xf32, #tpu.memory_space<vmem>>, vector<16x1xf32>
    %cst_18 = arith.constant 0.000000e+00 : f32
    %31 = vector.broadcast %cst_18 : f32 to vector<16x128xf32>
    %32 = arith.select %29, %5, %31 : vector<16x128xi1>, vector<16x128xf32>
    %cst_19 = arith.constant dense<0.000000e+00> : vector<16xf32>
    %33 = vector.multi_reduction <add>, %32, %cst_19 [1] : vector<16x128xf32> to vector<16xf32>
    %34 = vector.shape_cast %33 : vector<16xf32> to vector<16x1xf32>
    %35 = arith.addf %30, %34 : vector<16x1xf32>
    %c0_20 = arith.constant 0 : index
    %c0_21 = arith.constant 0 : index
    %36 = vector.load %arg8[%c0_20, %c0_21] : memref<16x1xf32, #tpu.memory_space<vmem>>, vector<16x1xf32>
    tpu.vector_store %arg8[%c0_20, %c0_21], %35 {strides = array<i32>} : memref<16x1xf32, #tpu.memory_space<vmem>>, vector<16x1xf32>,
    %c0_i32_22 = arith.constant 0 : i32
    %37 = arith.cmpi eq, %arg1, %c0_i32_22 : i32
    %38 = arith.extui %37 : i1 to i32
    %c0_i32_23 = arith.constant 0 : i32
    %39 = arith.cmpi ne, %38, %c0_i32_23 : i32
    scf.if %39 {
      %c0_24 = arith.constant 0 : index
      %c0_25 = arith.constant 0 : index
      %40 = vector.load %arg6[%c0_24, %c0_25] : memref<16x1xf32, #tpu.memory_space<vmem>>, vector<16x1xf32>
      %c0_26 = arith.constant 0 : index
      %c0_27 = arith.constant 0 : index
      %41 = vector.load %arg7[%c0_26, %c0_27] : memref<16x1xf32, #tpu.memory_space<vmem>>, vector<16x1xf32>
      %42 = math.log %41 : vector<16x1xf32>
      %43 = arith.addf %40, %42 : vector<16x1xf32>
      %c0_28 = arith.constant 0 : index
      %c0_29 = arith.constant 0 : index
      %44 = vector.load %arg8[%c0_28, %c0_29] : memref<16x1xf32, #tpu.memory_space<vmem>>, vector<16x1xf32>
      %45 = arith.subf %43, %44 : vector<16x1xf32>
      %c0_30 = arith.constant 0 : index
      %c0_31 = arith.constant 0 : index
      %46 = vector.load %arg5[%c0_30, %c0_31] : memref<16x1xf32, #tpu.memory_space<vmem>>, vector<16x1xf32>
      tpu.vector_store %arg5[%c0_30, %c0_31], %45 {strides = array<i32>} : memref<16x1xf32, #tpu.memory_space<vmem>>, vector<16x1xf32>,
    } else {
    }
    return
  }
  func.func @transform_0(%arg0: i32, %arg1: i32) -> (i32, i32) {
    %c0_i32 = arith.constant 0 : i32
    %c0_i32_0 = arith.constant 0 : i32
    return %arg0, %c0_i32 : i32, i32
  }
  func.func @transform_1(%arg0: i32, %arg1: i32) -> (i32, i32) {
    %c0_i32 = arith.constant 0 : i32
    %c0_i32_0 = arith.constant 0 : i32
    return %c0_i32, %arg1 : i32, i32
  }
  func.func @transform_2(%arg0: i32, %arg1: i32) -> (i32, i32) {
    %c0_i32 = arith.constant 0 : i32
    %c0_i32_0 = arith.constant 0 : i32
    return %arg0, %c0_i32 : i32, i32
  }
  func.func @transform_3(%arg0: i32, %arg1: i32) -> (i32, i32) {
    %c0_i32 = arith.constant 0 : i32
    %c0_i32_0 = arith.constant 0 : i32
    return %arg0, %c0_i32 : i32, i32
  }
}

</mosaic_0001>

<llo_original>
// kernel: tpu_custom_call.1
$region0: #{tpu_custom_call.1}
  #allocation0 [shape = 'u32[]', space=smem, size = 0x4, offset = 0x4, fixed_abs, tag = 'smem constant byte address 0x4 - core index']
  #allocation1 [shape = 'u32[144,128]{1,0:T(1,128)}', space=vmem, size = 0x12000, scoped, tag = 'internal scratch']
  #allocation2 [shape = 'f32[16,1]{1,0:T(8,128)}', space=vmem, size = 0x2000, scoped, tag = 'scratch operand']
  #allocation3 [shape = 'f32[16,1]{1,0:T(8,128)}', space=vmem, size = 0x2000, scoped, tag = 'scratch operand']
  #allocation4 [shape = 'f32[16,1]{1,0:T(8,128)}', space=vmem, size = 0x2000, scoped, tag = 'scratch operand']
  %s0 = inlined_call_operand.hbm [shape: bf16[16,32], index: 0, kind: input, shape index: {}]
  %s1 = inlined_call_operand.vmem [shape: bf16[32,128], index: 1, kind: input, shape index: {}]
  %s2 = inlined_call_operand.vmem [shape: s32[16,1], index: 2, kind: input, shape index: {}]
  %s3 = inlined_call_operand.vmem [shape: f32[16,1], index: 3, kind: output, shape index: {}]
  %s4 = sld [smem:[#allocation0]]
  $region34: #{tpu_custom_call.1} parent=0
    _
  %s6 = ssub.s32 1, %s4
  %s7 = scalar_select 0, %s6, %s4
  $region1: #{tpu_custom_call.1} parent=0
    #allocation5 [shape = 'u8[4096]{0}', space=vmem, size = 0x1000, scoped, tag = 'input window, operand 0, single buffered']
    #allocation6 [shape = 's32[1]{0}', space=sflag, size = 0x4, scoped, tag = 'scoped memory for tpu_custom_call.1']
    %8 = vsyncpa [#allocation6], 0
    // Predicated region
    $region2: #{tpu_custom_call.1} parent=1 // pred_check
      _
    $region3: #{tpu_custom_call.1} parent=1 // pred_check_branch
      %10 = sbr.rel (0) target = $region5
    $region4: #{tpu_custom_call.1} parent=1 // pred_region
      %s12 = ssub.s32 128, 128
      %13 = vsyncadd [#allocation6], %s12
      %s14 = sshll.u32 [#allocation5], 4
      %s15 = int_to_ptr.vmem [resolvable:$true] %s14
      %20 = dma.hbm_to_vmem [thread:$0]  %s0, 128, %s15, [#allocation6], 64, 64, 4
    $region5: #{tpu_custom_call.1} parent=1 // pred_fallthru
      _
    // Predicated region
    $region6: #{tpu_custom_call.1} parent=1 // pred_check
      _
    $region7: #{tpu_custom_call.1} parent=1 // pred_check_branch
      %22 = sbr.rel (0) target = $region9
    $region8: #{tpu_custom_call.1} parent=1 // pred_region
      _
    $region9: #{tpu_custom_call.1} parent=1 // pred_fallthru
      _
    // Predicated region
    $region10: #{tpu_custom_call.1} parent=1 // pred_check
      _
    $region11: #{tpu_custom_call.1} parent=1 // pred_check_branch
      %24 = sbr.rel (0) target = $region13
    $region12: #{tpu_custom_call.1} parent=1 // pred_region
      _
    $region13: #{tpu_custom_call.1} parent=1 // pred_fallthru
      _
    // Predicated region
    $region14: #{tpu_custom_call.1} parent=1 // pred_check
      _
    $region15: #{tpu_custom_call.1} parent=1 // pred_check_branch
      %26 = sbr.rel (0) target = $region17
    $region16: #{tpu_custom_call.1} parent=1 // pred_region
      %27 = dma.done [#allocation6], 128
    $region17: #{tpu_custom_call.1} parent=1 // pred_fallthru
      _
    %p29 = scmp.eq.s32.totalorder 0, 0
    // Predicated region
    $region18: #{tpu_custom_call.1} parent=1 // pred_check
      %p30 = pneg %p29
    $region19: #{tpu_custom_call.1} parent=1 // pred_check_branch
      %32 = sbr.rel (%p30) target = $region21
    $region20: #{tpu_custom_call.1} parent=1 // pred_region
      %vm33 = vcmask 7168
      %34 = vst.msk [vmem:[#allocation2] sm:$0xff] %vm33, -inf
      %35 = vst.msk [vmem:[#allocation2 + $0x8] sm:$0xff] %vm33, -inf
      %36 = vst.msk [vmem:[#allocation3] sm:$0xff] %vm33, 0.0
      %37 = vst.msk [vmem:[#allocation3 + $0x8] sm:$0xff] %vm33, 0.0
      %38 = vst.msk [vmem:[#allocation4] sm:$0xff] %vm33, 0.0
      %39 = vst.msk [vmem:[#allocation4 + $0x8] sm:$0xff] %vm33, 0.0
    $region21: #{tpu_custom_call.1} parent=1 // pred_fallthru
      _
    %v40 = vld [vmem:[#allocation5] sm:$0xf]
    %v41 = vld [vmem:[#allocation5 + $0x4] sm:$0xf]
    %v42 = vld [vmem:[%s1] sm:$0xf]
    %v43 = vld [vmem:[%s1 + $0x4] sm:$0xf]
    %v44 = vld [vmem:[%s1 + $0x8] sm:$0xf]
    %v45 = vld [vmem:[%s1 + $0xc] sm:$0xf]
    %v48 = vunpack.c.l.b16 %v40
    %v49 = vunpack.c.l.b16 %v41
    %v50 = vpack.c.b16 %v49, %v48
    %v55 = vunpack.c.l.b16 %v42
    %v56 = vunpack.c.l.b16 %v43
    %v57 = vunpack.c.l.b16 %v44
    %v58 = vunpack.c.l.b16 %v45
    %v59 = vpack.c.b16 %v56, %v55
    %v60 = vpack.c.b16 %v58, %v57
    %vm63 = vcmask 261120
    %v65 = vsel %vm63, %v50, 0
    %67 = vmatprep.subr.bf16.mxu0 0
    %68 = vmatpush1.bf16.msra.mxu0 %v59
    %69 = vmatprep.subr.bf16.mxu0 0
    %70 = vmatpush1.bf16.msra.mxu0 %v60
    %71 = vmatprep.subr.bf16.mxu0 0
    %72 = vmatpush1.bf16.msra.mxu0 0
    %73 = vmatprep.subr.bf16.mxu0 0
    %74 = vmatpush1.bf16.msra.mxu0 0
    %75 = vmatprep.subr.bf16.mxu0 0
    %76 = vmatpush1.bf16.msra.mxu0 0
    %77 = vmatprep.subr.bf16.mxu0 0
    %78 = vmatpush1.bf16.msra.mxu0 0
    %79 = vmatprep.subr.bf16.mxu0 0
    %80 = vmatpush1.bf16.msra.mxu0 0
    %81 = vmatprep.subr.bf16.mxu0 0
    %82 = vmatpush1.bf16.msra.mxu0 0
    %83 = vmatprep.subr.bf16.mxu0 0
    %84 = vmatpush1.bf16.msra.mxu0 0
    %85 = vmatprep.subr.bf16.mxu0 0
    %86 = vmatpush1.bf16.msra.mxu0 0
    %87 = vmatprep.subr.bf16.mxu0 0
    %88 = vmatpush1.bf16.msra.mxu0 0
    %89 = vmatprep.subr.bf16.mxu0 0
    %90 = vmatpush1.bf16.msra.mxu0 0
    %91 = vmatprep.subr.bf16.mxu0 0
    %92 = vmatpush1.bf16.msra.mxu0 0
    %93 = vmatprep.subr.bf16.mxu0 0
    %94 = vmatpush1.bf16.msra.mxu0 0
    %95 = vmatprep.subr.bf16.mxu0 0
    %96 = vmatpush1.bf16.msra.mxu0 0
    %97 = vmatprep.subr.bf16.mxu0 0
    %98 = vmatpush1.bf16.msra.mxu0 0
    %99 = vmatprep.mubr.bf16.mxu0 0
    %100 = vmatmul.mubr.bf16.gmra.mrb[0].mxu0 %v65
    %v101 = vpop.f32.mrb[0].mxu0
    %v102 = vadd.f32 0.0, %v101
    %v103 = vpop.f32.mrb[0].mxu0
    %v104 = vpop.f32.mrb[0].mxu0
    %v105 = vadd.f32 0.0, %v104
    %v106 = vpop.f32.mrb[0].mxu0
    %107 = vdwg.mxu0
    %v108 = vlaneseq
    %v109 = vand.u32 %v108, 127
    %s110 = smul.u32 0, 128
    %v111 = vstv %s110
    %v112 = vadd.s32 %v109, %v111
    %v113 = vld [vmem:[#allocation2] sm:$0xff]
    %v114 = vld [vmem:[#allocation2 + $0x8] sm:$0xff]
    %115 = vmax.xlane.f32.xlu0 %v102
    %v116 = vpop.xlane.xlu0 %115
    %117 = vmax.xlane.f32.xlu0 %v105
    %v118 = vpop.xlane.xlu0 %117
    %v119 = vmax.f32 %v113, %v116
    %v120 = vmax.f32 %v114, %v118
    %v121 = vsub.f32 %v113, %v119
    %v122 = vsub.f32 %v114, %v120
    %v123 = vmul.f32 %v121, 1.442695
    %v124 = vpow.pop %v123
    %v125 = vmul.f32 %v122, 1.442695
    %v126 = vpow.pop %v125
    %v127 = vld [vmem:[#allocation3] sm:$0xff]
    %v128 = vld [vmem:[#allocation3 + $0x8] sm:$0xff]
    %v129 = vmul.f32 %v124, %v127
    %v130 = vmul.f32 %v126, %v128
    %132 = vset.pattern.permute.xlu0 0
    %133 = vperm.xlu0 %132, %v119
    %v134 = vpop.permute.xlu0 %133
    %137 = vset.pattern.permute.xlu0 0
    %138 = vperm.xlu0 %137, %v120
    %v139 = vpop.permute.xlu0 %138
    %v141 = vsub.f32 %v102, %v134
    %v142 = vsub.f32 %v105, %v139
    %v143 = vmul.f32 %v141, 1.442695
    %v144 = vpow.pop %v143
    %v145 = vmul.f32 %v142, 1.442695
    %v146 = vpow.pop %v145
    %147 = vadd.xlane.f32.xlu0 %v144
    %v148 = vpop.xlane.xlu0 %147
    %149 = vadd.xlane.f32.xlu0 %v146
    %v150 = vpop.xlane.xlu0 %149
    %v151 = vadd.f32 %v129, %v148
    %v152 = vadd.f32 %v130, %v150
    %vm153 = vcmask 7168
    %154 = vst.msk [vmem:[#allocation3] sm:$0xff] %vm153, %v151
    %155 = vst.msk [vmem:[#allocation3 + $0x8] sm:$0xff] %vm153, %v152
    %156 = vst.msk [vmem:[#allocation2] sm:$0xff] %vm153, %v119
    %157 = vst.msk [vmem:[#allocation2 + $0x8] sm:$0xff] %vm153, %v120
    %v158 = vld [vmem:[%s2] sm:$0xff]
    %v159 = vld [vmem:[%s2 + $0x8] sm:$0xff]
    %160 = vset.pattern.permute.xlu0 0
    %161 = vperm.xlu0 %160, %v158
    %v162 = vpop.permute.xlu0 %161
    %163 = vset.pattern.permute.xlu0 0
    %164 = vperm.xlu0 %163, %v159
    %v165 = vpop.permute.xlu0 %164
    %vm166 = vcmp.eq.s32.totalorder %v112, %v162
    %vm167 = vcmp.eq.s32.totalorder %v112, %v165
    %v168 = vld [vmem:[#allocation4] sm:$0xff]
    %v169 = vld [vmem:[#allocation4 + $0x8] sm:$0xff]
    %v170 = vsel %vm166, %v102, 0.0
    %v171 = vsel %vm167, %v105, 0.0
    %172 = vadd.xlane.f32.xlu0 %v170
    %v173 = vpop.xlane.xlu0 %172
    %174 = vadd.xlane.f32.xlu0 %v171
    %v175 = vpop.xlane.xlu0 %174
    %v176 = vadd.f32 %v168, %v173
    %v177 = vadd.f32 %v169, %v175
    %178 = vst.msk [vmem:[#allocation4] sm:$0xff] %vm153, %v176
    %179 = vst.msk [vmem:[#allocation4 + $0x8] sm:$0xff] %vm153, %v177
    // Predicated region
    $region22: #{tpu_custom_call.1} parent=1 // pred_check
      %p180 = pneg %p29
    $region23: #{tpu_custom_call.1} parent=1 // pred_check_branch
      %182 = sbr.rel (%p180) target = $region25
    $region24: #{tpu_custom_call.1} parent=1 // pred_region
      %v183 = vld [vmem:[#allocation2] sm:$0xff]
      %v184 = vld [vmem:[#allocation2 + $0x8] sm:$0xff]
      %v185 = vld [vmem:[#allocation3] sm:$0xff]
      %v186 = vld [vmem:[#allocation3 + $0x8] sm:$0xff]
      %v187 = vlog2.pop %v185
      %v188 = vmul.f32 %v187, 0.6931472
      %v189 = vlog2.pop %v186
      %v190 = vmul.f32 %v189, 0.6931472
      %v191 = vadd.f32 %v183, %v188
      %v192 = vadd.f32 %v184, %v190
      %v193 = vld [vmem:[#allocation4] sm:$0xff]
      %v194 = vld [vmem:[#allocation4 + $0x8] sm:$0xff]
      %v195 = vsub.f32 %v191, %v193
      %v196 = vsub.f32 %v192, %v194
      %197 = vst.msk [vmem:[%s3] sm:$0xff] %vm153, %v195
      %198 = vst.msk [vmem:[%s3 + $0x8] sm:$0xff] %vm153, %v196
    $region25: #{tpu_custom_call.1} parent=1 // pred_fallthru
      _
    // Predicated region
    $region26: #{tpu_custom_call.1} parent=1 // pred_check
      _
    $region27: #{tpu_custom_call.1} parent=1 // pred_check_branch
      %200 = sbr.rel (0) target = $region29
    $region28: #{tpu_custom_call.1} parent=1 // pred_region
      _
    $region29: #{tpu_custom_call.1} parent=1 // pred_fallthru
      _
    // Predicated region
    $region30: #{tpu_custom_call.1} parent=1 // pred_check
      _
    $region31: #{tpu_custom_call.1} parent=1 // pred_check_branch
      %202 = sbr.rel (0) target = $region33
    $region32: #{tpu_custom_call.1} parent=1 // pred_region
      _
    $region33: #{tpu_custom_call.1} parent=1 // pred_fallthru
      _
    %203 = vsyncpa [#allocation6], 1

</llo_original>
